<compile_context>
chip_gen: v5e
topology: v5e:2x2
jax: 0.10.0
libtpu: 0.0.40
codegen_flags: <defaults>
</compile_context>

<pallas_src>
import functools
import math

import jax
import jax.numpy as jnp
from jax import lax
from jax.experimental import pallas as pl
from jax.experimental.pallas import tpu as pltpu


def _round_up(v, m):
    return (v + m - 1) // m * m


def _cdiv(a, b):
    return (a + b - 1) // b


# --------------------------- BatchNorm1d statistics --------------------------
def bn_stats_kernel(x_ref, gamma_ref, beta_ref, scale_ref, shift_ref,
                    sum_ref, mean_ref, sq_ref, *, total, n_pad, eps):
    """Two-pass BN stats folded into an affine: bn(x) == x*scale + shift.
    Phase 0 accumulates the mean, phase 1 the centered sum of squares.
    Zero rows used to pad (T, B) each contribute mean^2 and are subtracted."""
    p = pl.program_id(0)           # 0 = mean pass, 1 = variance pass
    i = pl.program_id(1)
    last = pl.num_programs(1) - 1

    @pl.when((p == 0) & (i == 0))
    def _():
        sum_ref[...] = jnp.zeros_like(sum_ref)

    @pl.when(p == 0)
    def _():
        sum_ref[...] += jnp.sum(x_ref[...], axis=0, keepdims=True)

    @pl.when((p == 0) & (i == last))
    def _():
        mean_ref[...] = sum_ref[...] / total

    @pl.when((p == 1) & (i == 0))
    def _():
        sq_ref[...] = jnp.zeros_like(sq_ref)

    @pl.when(p == 1)
    def _():
        d = x_ref[...] - mean_ref[...]
        sq_ref[...] += jnp.sum(d * d, axis=0, keepdims=True)

    @pl.when((p == 1) & (i == last))
    def _():
        mean = mean_ref[...]
        var = (sq_ref[...] - n_pad * mean * mean) / total    # biased variance
        var = jnp.maximum(var, 0.0)
        s = gamma_ref[...] * lax.rsqrt(var + eps)
        scale_ref[...] = s
        shift_ref[...] = beta_ref[...] - mean * s


# ------------------------- input projection (one MXU pass) -------------------
def proj_kernel(x_ref, w_ref, b_ref, gi_ref):
    """gi = bn(x) @ W_ih + b_ih for both directions; BN already folded into
    (w, b) by the wrapper.  Stored bf16 to halve HBM/VMEM for the gi buffer."""
    gi = jnp.dot(x_ref[...], w_ref[...],
                 preferred_element_type=jnp.float32) + b_ref[...]
    gi_ref[...] = gi.astype(jnp.bfloat16)


# ----------------------- fused bidirectional GRU recurrence ------------------
def gru_kernel(len_ref, gif_ref, gib_ref, whf_ref, whb_ref, bhf_ref, bhb_ref,
               h0_ref, outf_ref, outb_ref, hf_ref, hb_ref):
    """One (batch block, time chunk) grid step.  gi chunks arrive pre-projected
    (bf16) and are streamed/prefetched by the BlockSpec pipeline; hidden states
    carry across chunks in VMEM scratch (f32)."""
    Tc, Bb, G3 = gif_ref.shape
    Hp = G3 // 3
    c = pl.program_id(1)
    nT = pl.num_programs(1)
    cb = nT - 1 - c                     # global chunk handled by backward dir

    @pl.when(c == 0)
    def _():
        hf_ref[...] = h0_ref[0]
        hb_ref[...] = h0_ref[1]

    whf = whf_ref[...]                  # (Hp, 3Hp) bf16, hoisted out of loop
    whb = whb_ref[...]
    bhf = bhf_ref[...]                  # (1, 3Hp) f32
    bhb = bhb_ref[...]
    lengths = len_ref[...]              # (Bb, 1) int32
    t0_f = c * Tc
    t0_b = cb * Tc

    def gru_cell(gi, gh, h):            # PyTorch gate order [r, z, n]
        r = jax.nn.sigmoid(gi[:, :Hp] + gh[:, :Hp])
        z = jax.nn.sigmoid(gi[:, Hp:2 * Hp] + gh[:, Hp:2 * Hp])
        n = jnp.tanh(gi[:, 2 * Hp:] + r * gh[:, 2 * Hp:])
        return (1.0 - z) * n + z * h

    def step(s, carry):
        h_f, h_b = carry                # (Bb, Hp) f32 each; no stacked copies
        sb = Tc - 1 - s
        gi_f = gif_ref[s].astype(jnp.float32)
        gi_b = gib_ref[sb].astype(jnp.float32)
        gh_f = jnp.dot(h_f.astype(jnp.bfloat16), whf,
                       preferred_element_type=jnp.float32) + bhf
        gh_b = jnp.dot(h_b.astype(jnp.bfloat16), whb,
                       preferred_element_type=jnp.float32) + bhb
        hf_new = gru_cell(gi_f, gh_f, h_f)
        hb_new = gru_cell(gi_b, gh_b, h_b)
        valid_f = (t0_f + s) < lengths          # pack_padded masking
        valid_b = (t0_b + sb) < lengths
        outf_ref[s] = jnp.where(valid_f, hf_new, 0.0)
        outb_ref[sb] = jnp.where(valid_b, hb_new, 0.0)
        return (jnp.where(valid_f, hf_new, h_f),
                jnp.where(valid_b, hb_new, h_b))

    h_f, h_b = lax.fori_loop(0, Tc, step, (hf_ref[...], hb_ref[...]), unroll=2)
    hf_ref[...] = h_f
    hb_ref[...] = h_b


# --------------------------- out = forward + backward ------------------------
def add_kernel(a_ref, b_ref, o_ref):
    o_ref[...] = a_ref[...] + b_ref[...]


# ------------------------------------ wrapper --------------------------------
def batch_rnn(x, lengths, params, h0, *, hidden_size):
    """x: (T, B, F) f32, lengths: (B, 1) int32, h0: (2, B, H) f32 -> (T, B, H)."""
    T, B, F = x.shape
    H = hidden_size
    Hp = _round_up(H, 128)                    # lane-dense hidden / gate width

    # --- generation-aware VMEM budget (v5e/v6e: 128 MiB, v7x: 64 MiB) -------
    try:
        vmem_cap = int(pltpu.get_tpu_info().vmem_capacity_bytes)
    except Exception:
        vmem_cap = 64 * 1024 * 1024           # conservative fallback (v7x)
    vmem_limit = int(vmem_cap * 0.85)         # leave compiler-scratch headroom
    budget = int(vmem_cap * 0.60)             # target data working set

    # --- batch tiling: bigger M per recurrent matmul, but keep >= 2 balanced
    # blocks (both v7x TensorCores busy) when the batch allows it. -----------
    b8 = _round_up(B, 8)
    block_b = min(64, _round_up(_cdiv(b8, 2), 8)) if b8 >= 16 else b8

    def rec_bytes(tc, bb):
        gi = 2 * 2 * tc * bb * 3 * Hp * 2          # gi fwd+bwd chunks, x2 buf, bf16
        outs = 2 * 2 * tc * bb * Hp * 4            # out fwd+bwd chunks, x2 buf, f32
        wts = 2 * 2 * (Hp * 3 * Hp * 2 + 3 * Hp * 4)
        carry = 4 * bb * Hp * 4 + 2 * bb * 4
        tmp = 8 * bb * 3 * Hp * 4                  # per-step gate temporaries
        return gi + outs + wts + carry + tmp

    while rec_bytes(8, block_b) > budget and block_b > 8:
        block_b = max(8, _round_up(block_b // 2, 8))
    Bp = _round_up(B, block_b)
    nb = Bp // block_b

    # --- time chunking: VMEM O(Tc); chunks streamed by the BlockSpec pipeline
    Tc = _round_up(_cdiv(T, _cdiv(T, 128)), 8)     # ~128, minimal T padding
    while rec_bytes(Tc, block_b) > budget and Tc > 8:
        Tc = max(8, _round_up(Tc // 2, 8))
    # TODO(synk): for very large F/H (recurrent weights alone above the VMEM
    # budget) also tile the gate (3Hp) dimension of whh / wih inside the kernels.
    Tp = _round_up(T, Tc)
    nT = Tp // Tc
    Ntot = Tp * Bp
    tile_m = math.gcd(Ntot, 512)                   # projection / stats row tile

    # --- pad activations (zero rows are stats- and recurrence-neutral) ------
    x_p = jnp.pad(x, ((0, Tp - T), (0, Bp - B), (0, 0)))
    x2d = x_p.reshape(Ntot, F)                     # f32, for BN statistics
    x2d_bf = x2d.astype(jnp.bfloat16)              # bf16 MXU operand
    len_p = jnp.pad(lengths.astype(jnp.int32), ((0, Bp - B), (0, 0)))
    h0_p = jnp.pad(h0, ((0, 0), (0, Bp - B), (0, Hp - H)))

    # --------------------------- BN statistics ------------------------------
    scale, shift = pl.pallas_call(
        functools.partial(bn_stats_kernel, total=float(T * B),
                          n_pad=float(Ntot - T * B), eps=1e-5),
        grid=(2, Ntot // tile_m),
        out_shape=(jax.ShapeDtypeStruct((1, F), jnp.float32),
                   jax.ShapeDtypeStruct((1, F), jnp.float32)),
        in_specs=[pl.BlockSpec((tile_m, F), lambda p, i: (i, 0)),
                  pl.BlockSpec((1, F), lambda p, i: (0, 0)),
                  pl.BlockSpec((1, F), lambda p, i: (0, 0))],
        out_specs=(pl.BlockSpec((1, F), lambda p, i: (0, 0)),
                   pl.BlockSpec((1, F), lambda p, i: (0, 0))),
        scratch_shapes=[pltpu.VMEM((1, F), jnp.float32)] * 3,
        compiler_params=pltpu.CompilerParams(
            dimension_semantics=("arbitrary", "arbitrary"),
            vmem_limit_bytes=vmem_limit),
    )(x2d, params["gamma"], params["beta"])

    # --- fold BN into effective input weights (wrapper-side, tiny) ----------
    def pad_gates(w):                   # (..., 3H) -> (..., 3Hp), per-gate pad
        pads = [(0, 0)] * (w.ndim - 1) + [(0, Hp - H)]
        return jnp.concatenate(
            [jnp.pad(w[..., g * H:(g + 1) * H], pads) for g in range(3)],
            axis=-1)

    wih = jnp.concatenate([pad_gates(params["wih_f"]),
                           pad_gates(params["wih_b"])], axis=-1)    # (F, 6Hp)
    bih = jnp.concatenate([pad_gates(params["bih_f"]),
                           pad_gates(params["bih_b"])], axis=-1)    # (1, 6Hp)
    wih_eff = (scale.reshape(F, 1) * wih).astype(jnp.bfloat16)      # BN scale
    b_eff = bih + jnp.dot(shift, wih)                               # BN shift

    whh_f = jnp.pad(pad_gates(params["whh_f"]),
                    ((0, Hp - H), (0, 0))).astype(jnp.bfloat16)     # (Hp, 3Hp)
    whh_b = jnp.pad(pad_gates(params["whh_b"]),
                    ((0, Hp - H), (0, 0))).astype(jnp.bfloat16)
    bhh_f = pad_gates(params["bhh_f"])                              # (1, 3Hp)
    bhh_b = pad_gates(params["bhh_b"])

    # --------------- input projection for both directions (bf16) ------------
    gi2 = pl.pallas_call(
        proj_kernel,
        grid=(Ntot // tile_m,),
        out_shape=jax.ShapeDtypeStruct((Ntot, 6 * Hp), jnp.bfloat16),
        in_specs=[pl.BlockSpec((tile_m, F), lambda i: (i, 0)),
                  pl.BlockSpec((F, 6 * Hp), lambda i: (0, 0)),
                  pl.BlockSpec((1, 6 * Hp), lambda i: (0, 0))],
        out_specs=pl.BlockSpec((tile_m, 6 * Hp), lambda i: (i, 0)),
        compiler_params=pltpu.CompilerParams(
            dimension_semantics=("parallel",),
            vmem_limit_bytes=vmem_limit),
    )(x2d_bf, wih_eff, b_eff)
    gi3 = gi2.reshape(Tp, Bp, 6 * Hp)

    # --------- fused bidirectional recurrence, streamed over T chunks -------
    out_fwd, out_bwd = pl.pallas_call(
        gru_kernel,
        grid=(nb, nT),
        out_shape=(jax.ShapeDtypeStruct((Tp, Bp, Hp), jnp.float32),
                   jax.ShapeDtypeStruct((Tp, Bp, Hp), jnp.float32)),
        in_specs=[
            pl.BlockSpec((block_b, 1), lambda b, c: (b, 0)),              # lens
            pl.BlockSpec((Tc, block_b, 3 * Hp), lambda b, c: (c, b, 0)),  # gi fwd
            pl.BlockSpec((Tc, block_b, 3 * Hp),
                         lambda b, c, nT=nT: (nT - 1 - c, b, 1)),         # gi bwd
            pl.BlockSpec((Hp, 3 * Hp), lambda b, c: (0, 0)),              # whh_f
            pl.BlockSpec((Hp, 3 * Hp), lambda b, c: (0, 0)),              # whh_b
            pl.BlockSpec((1, 3 * Hp), lambda b, c: (0, 0)),               # bhh_f
            pl.BlockSpec((1, 3 * Hp), lambda b, c: (0, 0)),               # bhh_b
            pl.BlockSpec((2, block_b, Hp), lambda b, c: (0, b, 0)),       # h0
        ],
        out_specs=(pl.BlockSpec((Tc, block_b, Hp), lambda b, c: (c, b, 0)),
                   pl.BlockSpec((Tc, block_b, Hp),
                                lambda b, c, nT=nT: (nT - 1 - c, b, 0))),
        scratch_shapes=[pltpu.VMEM((block_b, Hp), jnp.float32),   # fwd carry
                        pltpu.VMEM((block_b, Hp), jnp.float32)],  # bwd carry
        compiler_params=pltpu.CompilerParams(
            dimension_semantics=("parallel", "arbitrary"),
            vmem_limit_bytes=vmem_limit),
    )(len_p, gi3, gi3, whh_f, whh_b, bhh_f, bhh_b, h0_p)

    # ---------------------- out = forward + backward ------------------------
    out_p = pl.pallas_call(
        add_kernel,
        grid=(nT, nb),
        out_shape=jax.ShapeDtypeStruct((Tp, Bp, Hp), jnp.float32),
        in_specs=[pl.BlockSpec((Tc, block_b, Hp), lambda c, b: (c, b, 0)),
                  pl.BlockSpec((Tc, block_b, Hp), lambda c, b: (c, b, 0))],
        out_specs=pl.BlockSpec((Tc, block_b, Hp), lambda c, b: (c, b, 0)),
        compiler_params=pltpu.CompilerParams(
            dimension_semantics=("parallel", "parallel"),
            vmem_limit_bytes=vmem_limit),
    )(out_fwd, out_bwd)

    return out_p[:T, :B, :H]


def init_params(key, input_size, hidden_size):
    F, H = input_size, hidden_size
    ks = jax.random.split(key, 8)
    bound = 1.0 / (H ** 0.5)

    def u(k, shape):
        return jax.random.uniform(k, shape, jnp.float32, -bound, bound)

    return {
        # BatchNorm1d: weight init 1, bias init 0 (PyTorch default)
        "gamma": jnp.ones((1, F), jnp.float32),
        "beta": jnp.zeros((1, F), jnp.float32),
        # GRU weights stored transposed for right-multiplication, gate order
        # [r, z, n] matching PyTorch's stacked layout.
        "wih_f": u(ks[0], (F, 3 * H)),
        "whh_f": u(ks[1], (H, 3 * H)),
        "bih_f": u(ks[2], (1, 3 * H)),
        "bhh_f": u(ks[3], (1, 3 * H)),
        "wih_b": u(ks[4], (F, 3 * H)),
        "whh_b": u(ks[5], (H, 3 * H)),
        "bih_b": u(ks[6], (1, 3 * H)),
        "bhh_b": u(ks[7], (1, 3 * H)),
    }


if __name__ == "__main__":
    T, B, F, H = 8, 2, 16, 32

    key = jax.random.PRNGKey(0)
    k_x, k_h0, k_p = jax.random.split(key, 3)

    x = jax.random.normal(k_x, (T, B, F), jnp.float32)
    # per-sequence valid lengths (<= T), shape (B, 1) int32
    lengths = jnp.array([[T], [T - 3]], dtype=jnp.int32)
    # deterministic stand-in for torch.randn((2, B, H)) initial states
    h0 = jax.random.normal(k_h0, (2, B, H), jnp.float32)
    params = init_params(k_p, F, H)

    out = batch_rnn(x, lengths, params, h0, hidden_size=H)
    out = jax.block_until_ready(out)

    assert out.shape == (T, B, H)
    assert bool(jnp.all(jnp.isfinite(out)))
    # padded positions of sequence 1 (t >= T-3) must be exactly zero
    assert bool(jnp.all(out[T - 3:, 1, :] == 0.0))

    print("KERNEL_OK")
</pallas_src>

<mosaic_0001>
module attributes {stable_mosaic.version = 11 : i64} {
  func.func @bn_stats_kernel(%arg0: i32, %arg1: i32, %arg2: memref<64x16xf32, #tpu.memory_space<vmem>>, %arg3: memref<1x16xf32, #tpu.memory_space<vmem>>, %arg4: memref<1x16xf32, #tpu.memory_space<vmem>>, %arg5: memref<1x16xf32, #tpu.memory_space<vmem>>, %arg6: memref<1x16xf32, #tpu.memory_space<vmem>>, %arg7: memref<1x16xf32, #tpu.memory_space<vmem>>, %arg8: memref<1x16xf32, #tpu.memory_space<vmem>>, %arg9: memref<1x16xf32, #tpu.memory_space<vmem>>) attributes {dimension_semantics = [#tpu.dimension_semantics<arbitrary>, #tpu.dimension_semantics<arbitrary>], iteration_bounds = array<i64: 2, 1>, scalar_prefetch = 0 : i64, scratch_operands = 3 : i64, tpu.core_type = #tpu.core_type<tc>, window_params = [{transform_indices = @transform_0, window_bounds = array<i64: 64, 16>}, {pipeline_mode = #tpu.pipeline_mode<synchronous>, transform_indices = @transform_1, window_bounds = array<i64: 1, 16>}, {pipeline_mode = #tpu.pipeline_mode<synchronous>, transform_indices = @transform_2, window_bounds = array<i64: 1, 16>}, {pipeline_mode = #tpu.pipeline_mode<synchronous>, transform_indices = @transform_3, window_bounds = array<i64: 1, 16>}, {pipeline_mode = #tpu.pipeline_mode<synchronous>, transform_indices = @transform_4, window_bounds = array<i64: 1, 16>}]} {
    %c0_i32 = arith.constant 0 : i32
    %0 = arith.cmpi eq, %arg0, %c0_i32 : i32
    %c0_i32_0 = arith.constant 0 : i32
    %1 = arith.cmpi eq, %arg1, %c0_i32_0 : i32
    %2 = arith.andi %0, %1 : i1
    %3 = arith.extui %2 : i1 to i32
    %c0_i32_1 = arith.constant 0 : i32
    %4 = arith.cmpi ne, %3, %c0_i32_1 : i32
    scf.if %4 {
      %cst = arith.constant 0.000000e+00 : f32
      %26 = vector.broadcast %cst : f32 to vector<1x16xf32>
      %c0 = arith.constant 0 : index
      %c0_14 = arith.constant 0 : index
      %27 = vector.load %arg7[%c0, %c0_14] : memref<1x16xf32, #tpu.memory_space<vmem>>, vector<1x16xf32>
      tpu.vector_store %arg7[%c0, %c0_14], %26 {strides = array<i32>} : memref<1x16xf32, #tpu.memory_space<vmem>>, vector<1x16xf32>,
    } else {
    }
    %c0_i32_2 = arith.constant 0 : i32
    %5 = arith.cmpi eq, %arg0, %c0_i32_2 : i32
    %6 = arith.extui %5 : i1 to i32
    %c0_i32_3 = arith.constant 0 : i32
    %7 = arith.cmpi ne, %6, %c0_i32_3 : i32
    scf.if %7 {
      %c0 = arith.constant 0 : index
      %c0_14 = arith.constant 0 : index
      %26 = vector.load %arg7[%c0, %c0_14] : memref<1x16xf32, #tpu.memory_space<vmem>>, vector<1x16xf32>
      %c0_15 = arith.constant 0 : index
      %c0_16 = arith.constant 0 : index
      %27 = vector.load %arg2[%c0_15, %c0_16] : memref<64x16xf32, #tpu.memory_space<vmem>>, vector<64x16xf32>
      %cst = arith.constant dense<0.000000e+00> : vector<16xf32>
      %28 = vector.multi_reduction <add>, %27, %cst [0] : vector<64x16xf32> to vector<16xf32>
      %29 = vector.shape_cast %28 : vector<16xf32> to vector<1x16xf32>
      %30 = arith.addf %26, %29 : vector<1x16xf32>
      %c0_17 = arith.constant 0 : index
      %c0_18 = arith.constant 0 : index
      %31 = vector.load %arg7[%c0_17, %c0_18] : memref<1x16xf32, #tpu.memory_space<vmem>>, vector<1x16xf32>
      tpu.vector_store %arg7[%c0_17, %c0_18], %30 {strides = array<i32>} : memref<1x16xf32, #tpu.memory_space<vmem>>, vector<1x16xf32>,
    } else {
    }
    %c0_i32_4 = arith.constant 0 : i32
    %8 = arith.cmpi eq, %arg0, %c0_i32_4 : i32
    %c0_i32_5 = arith.constant 0 : i32
    %9 = arith.cmpi eq, %arg1, %c0_i32_5 : i32
    %10 = arith.andi %8, %9 : i1
    %11 = arith.extui %10 : i1 to i32
    %c0_i32_6 = arith.constant 0 : i32
    %12 = arith.cmpi ne, %11, %c0_i32_6 : i32
    scf.if %12 {
      %c0 = arith.constant 0 : index
      %c0_14 = arith.constant 0 : index
      %26 = vector.load %arg7[%c0, %c0_14] : memref<1x16xf32, #tpu.memory_space<vmem>>, vector<1x16xf32>
      %cst = arith.constant 1.600000e+01 : f32
      %27 = vector.broadcast %cst : f32 to vector<1x16xf32>
      %28 = arith.divf %26, %27 : vector<1x16xf32>
      %c0_15 = arith.constant 0 : index
      %c0_16 = arith.constant 0 : index
      %29 = vector.load %arg8[%c0_15, %c0_16] : memref<1x16xf32, #tpu.memory_space<vmem>>, vector<1x16xf32>
      tpu.vector_store %arg8[%c0_15, %c0_16], %28 {strides = array<i32>} : memref<1x16xf32, #tpu.memory_space<vmem>>, vector<1x16xf32>,
    } else {
    }
    %c1_i32 = arith.constant 1 : i32
    %13 = arith.cmpi eq, %arg0, %c1_i32 : i32
    %c0_i32_7 = arith.constant 0 : i32
    %14 = arith.cmpi eq, %arg1, %c0_i32_7 : i32
    %15 = arith.andi %13, %14 : i1
    %16 = arith.extui %15 : i1 to i32
    %c0_i32_8 = arith.constant 0 : i32
    %17 = arith.cmpi ne, %16, %c0_i32_8 : i32
    scf.if %17 {
      %cst = arith.constant 0.000000e+00 : f32
      %26 = vector.broadcast %cst : f32 to vector<1x16xf32>
      %c0 = arith.constant 0 : index
      %c0_14 = arith.constant 0 : index
      %27 = vector.load %arg9[%c0, %c0_14] : memref<1x16xf32, #tpu.memory_space<vmem>>, vector<1x16xf32>
      tpu.vector_store %arg9[%c0, %c0_14], %26 {strides = array<i32>} : memref<1x16xf32, #tpu.memory_space<vmem>>, vector<1x16xf32>,
    } else {
    }
    %c1_i32_9 = arith.constant 1 : i32
    %18 = arith.cmpi eq, %arg0, %c1_i32_9 : i32
    %19 = arith.extui %18 : i1 to i32
    %c0_i32_10 = arith.constant 0 : i32
    %20 = arith.cmpi ne, %19, %c0_i32_10 : i32
    scf.if %20 {
      %c0 = arith.constant 0 : index
      %c0_14 = arith.constant 0 : index
      %26 = vector.load %arg2[%c0, %c0_14] : memref<64x16xf32, #tpu.memory_space<vmem>>, vector<64x16xf32>
      %c0_15 = arith.constant 0 : index
      %c0_16 = arith.constant 0 : index
      %27 = vector.load %arg8[%c0_15, %c0_16] : memref<1x16xf32, #tpu.memory_space<vmem>>, vector<1x16xf32>
      %28 = vector.broadcast %27 : vector<1x16xf32> to vector<64x16xf32>
      %29 = arith.subf %26, %28 : vector<64x16xf32>
      %c0_17 = arith.constant 0 : index
      %c0_18 = arith.constant 0 : index
      %30 = vector.load %arg9[%c0_17, %c0_18] : memref<1x16xf32, #tpu.memory_space<vmem>>, vector<1x16xf32>
      %31 = arith.mulf %29, %29 : vector<64x16xf32>
      %cst = arith.constant dense<0.000000e+00> : vector<16xf32>
      %32 = vector.multi_reduction <add>, %31, %cst [0] : vector<64x16xf32> to vector<16xf32>
      %33 = vector.shape_cast %32 : vector<16xf32> to vector<1x16xf32>
      %34 = arith.addf %30, %33 : vector<1x16xf32>
      %c0_19 = arith.constant 0 : index
      %c0_20 = arith.constant 0 : index
      %35 = vector.load %arg9[%c0_19, %c0_20] : memref<1x16xf32, #tpu.memory_space<vmem>>, vector<1x16xf32>
      tpu.vector_store %arg9[%c0_19, %c0_20], %34 {strides = array<i32>} : memref<1x16xf32, #tpu.memory_space<vmem>>, vector<1x16xf32>,
    } else {
    }
    %c1_i32_11 = arith.constant 1 : i32
    %21 = arith.cmpi eq, %arg0, %c1_i32_11 : i32
    %c0_i32_12 = arith.constant 0 : i32
    %22 = arith.cmpi eq, %arg1, %c0_i32_12 : i32
    %23 = arith.andi %21, %22 : i1
    %24 = arith.extui %23 : i1 to i32
    %c0_i32_13 = arith.constant 0 : i32
    %25 = arith.cmpi ne, %24, %c0_i32_13 : i32
    scf.if %25 {
      %c0 = arith.constant 0 : index
      %c0_14 = arith.constant 0 : index
      %26 = vector.load %arg8[%c0, %c0_14] : memref<1x16xf32, #tpu.memory_space<vmem>>, vector<1x16xf32>
      %c0_15 = arith.constant 0 : index
      %c0_16 = arith.constant 0 : index
      %27 = vector.load %arg9[%c0_15, %c0_16] : memref<1x16xf32, #tpu.memory_space<vmem>>, vector<1x16xf32>
      %cst = arith.constant 4.800000e+01 : f32
      %28 = vector.broadcast %cst : f32 to vector<1x16xf32>
      %29 = arith.mulf %28, %26 : vector<1x16xf32>
      %30 = arith.mulf %29, %26 : vector<1x16xf32>
      %31 = arith.subf %27, %30 : vector<1x16xf32>
      %cst_17 = arith.constant 1.600000e+01 : f32
      %32 = vector.broadcast %cst_17 : f32 to vector<1x16xf32>
      %33 = arith.divf %31, %32 : vector<1x16xf32>
      %cst_18 = arith.constant 0.000000e+00 : f32
      %34 = vector.broadcast %cst_18 : f32 to vector<1x16xf32>
      %35 = arith.maximumf %33, %34 : vector<1x16xf32>
      %c0_19 = arith.constant 0 : index
      %c0_20 = arith.constant 0 : index
      %36 = vector.load %arg3[%c0_19, %c0_20] : memref<1x16xf32, #tpu.memory_space<vmem>>, vector<1x16xf32>
      %cst_21 = arith.constant 9.99999974E-6 : f32
      %37 = vector.broadcast %cst_21 : f32 to vector<1x16xf32>
      %38 = arith.addf %35, %37 : vector<1x16xf32>
      %39 = math.rsqrt %38 : vector<1x16xf32>
      %40 = arith.mulf %36, %39 : vector<1x16xf32>
      %c0_22 = arith.constant 0 : index
      %c0_23 = arith.constant 0 : index
      %41 = vector.load %arg5[%c0_22, %c0_23] : memref<1x16xf32, #tpu.memory_space<vmem>>, vector<1x16xf32>
      tpu.vector_store %arg5[%c0_22, %c0_23], %40 {strides = array<i32>} : memref<1x16xf32, #tpu.memory_space<vmem>>, vector<1x16xf32>,
      %c0_24 = arith.constant 0 : index
      %c0_25 = arith.constant 0 : index
      %42 = vector.load %arg4[%c0_24, %c0_25] : memref<1x16xf32, #tpu.memory_space<vmem>>, vector<1x16xf32>
      %43 = arith.mulf %26, %40 : vector<1x16xf32>
      %44 = arith.subf %42, %43 : vector<1x16xf32>
      %c0_26 = arith.constant 0 : index
      %c0_27 = arith.constant 0 : index
      %45 = vector.load %arg6[%c0_26, %c0_27] : memref<1x16xf32, #tpu.memory_space<vmem>>, vector<1x16xf32>
      tpu.vector_store %arg6[%c0_26, %c0_27], %44 {strides = array<i32>} : memref<1x16xf32, #tpu.memory_space<vmem>>, vector<1x16xf32>,
    } else {
    }
    return
  }
  func.func @transform_0(%arg0: i32, %arg1: i32) -> (i32, i32) {
    %c0_i32 = arith.constant 0 : i32
    %c0_i32_0 = arith.constant 0 : i32
    return %arg1, %c0_i32 : i32, i32
  }
  func.func @transform_1(%arg0: i32, %arg1: i32) -> (i32, i32) {
    %c0_i32 = arith.constant 0 : i32
    %c0_i32_0 = arith.constant 0 : i32
    %c0_i32_1 = arith.constant 0 : i32
    return %c0_i32, %c0_i32_0 : i32, i32
  }
  func.func @transform_2(%arg0: i32, %arg1: i32) -> (i32, i32) {
    %c0_i32 = arith.constant 0 : i32
    %c0_i32_0 = arith.constant 0 : i32
    %c0_i32_1 = arith.constant 0 : i32
    return %c0_i32, %c0_i32_0 : i32, i32
  }
  func.func @transform_3(%arg0: i32, %arg1: i32) -> (i32, i32) {
    %c0_i32 = arith.constant 0 : i32
    %c0_i32_0 = arith.constant 0 : i32
    %c0_i32_1 = arith.constant 0 : i32
    return %c0_i32, %c0_i32_0 : i32, i32
  }
  func.func @transform_4(%arg0: i32, %arg1: i32) -> (i32, i32) {
    %c0_i32 = arith.constant 0 : i32
    %c0_i32_0 = arith.constant 0 : i32
    %c0_i32_1 = arith.constant 0 : i32
    return %c0_i32, %c0_i32_0 : i32, i32
  }
}

</mosaic_0001>

<llo_original>
// kernel: tpu_custom_call.1
$region0: #{tpu_custom_call.1}
  #allocation0 [shape = 'u32[]', space=smem, size = 0x4, offset = 0x4, fixed_abs, tag = 'smem constant byte address 0x4 - core index']
  #allocation1 [shape = 'u32[72,128]{1,0:T(1,128)}', space=vmem, size = 0x9000, scoped, tag = 'internal scratch']
  #allocation2 [shape = 'f32[1,16]{1,0:T(1,128)}', space=vmem, size = 0x200, scoped, tag = 'scratch operand']
  #allocation3 [shape = 'f32[1,16]{1,0:T(1,128)}', space=vmem, size = 0x200, scoped, tag = 'scratch operand']
  #allocation4 [shape = 'f32[1,16]{1,0:T(1,128)}', space=vmem, size = 0x200, scoped, tag = 'scratch operand']
  %s0 = inlined_call_operand.vmem [shape: f32[64,16], index: 0, kind: input, shape index: {}]
  %s1 = inlined_call_operand.vmem [shape: f32[1,16], index: 1, kind: input, shape index: {}]
  %s2 = inlined_call_operand.vmem [shape: f32[1,16], index: 2, kind: input, shape index: {}]
  %s3 = inlined_call_operand.hbm [shape: f32[1,16], index: 3, kind: output, shape index: {0}]
  %s4 = inlined_call_operand.hbm [shape: f32[1,16], index: 4, kind: output, shape index: {1}]
  %5 = xla_tuple %s3, %s4
  %s6 = sld [smem:[#allocation0]]
  $region77: #{tpu_custom_call.1} parent=0
    _
  %s8 = ssub.s32 1, %s6
  %s9 = scalar_select 0, %s8, %s6
  $region1: #{tpu_custom_call.1} parent=0
    #allocation5 [shape = 'u8[512]{0}', space=vmem, size = 0x400, scoped, tag = 'output window, operand 0, single buffered']
    #allocation6 [shape = 's32[2]{0}', space=sflag, size = 0x8, scoped, tag = 'scoped memory for tpu_custom_call.1']
    #allocation7 [shape = 'u8[512]{0}', space=vmem, size = 0x400, scoped, tag = 'output window, operand 1, single buffered']
    #allocation8 [shape = 's32[1]{0}', space=sflag, size = 0x4, scoped, tag = 'scoped memory for tpu_custom_call.1']
    %10 = vsyncpa [#allocation6], 0
    %11 = vsyncpa [#allocation8], 0
    loop: start=0, step=1, limit=4
    $region2: #{tpu_custom_call.1} parent=1 // loop_pre_header
      _
    $region3: #{tpu_custom_call.1} parent=1 // loop_header
      %s13 = sphi 0, %s17
      %p14 = scmp.ge.s32.totalorder %s13, 4
      %s20 = sphi 0, %s32
      %s21 = sphi 0, %s28
      %s22 = sphi 0, %s20
      %s23 = sphi 0, %s21
      %s24 = sphi 0, %s22
      %s25 = sphi 0, %s23
      %s35 = sphi 0, %s37
      %s38 = sphi 0, %s35
      %s39 = sphi 0, %s38
      %s55 = sphi 0, %s39
      %s59 = sphi 0, %s59
      %s61 = sphi 0, %s59
      %s62 = sphi 0, %s61
      %s76 = sphi 0, %s62
      %s80 = sphi 0, %s80
      %s82 = sphi 0, %s80
      %s83 = sphi 0, %s82
      %s97 = sphi 0, %s83
      %s101 = sphi 0, %s101
      %s103 = sphi 0, %s101
      %s104 = sphi 0, %s103
      %s118 = sphi 0, %s104
      %s122 = sphi 0, %s122
      %s124 = sphi 0, %s122
      %s125 = sphi 0, %s124
      %s139 = sphi 0, %s125
    $region4: #{tpu_custom_call.1} parent=1 // loop_header_branch
      %16 = sbr.rel (%p14) target = $region8
    $region5: #{tpu_custom_call.1} parent=1 // loop_body
      %s18 = ssub.s32 %s13, 1
      %s19 = ssub.s32 %s13, 2
      %s26 = sadd.s32 1, %s21
      %p27 = scmp.ge.s32.totalorder %s26, 1
      %s28 = scalar_select %p27, 0, %s26
      %s29 = sadd.s32 1, %s20
      %s30 = scalar_select %p27, %s29, %s20
      %p31 = scmp.ge.s32.totalorder %s30, 2
      %s32 = scalar_select %p31, 0, %s30
      %s33 = ssub.s32 %s21, %s28
      %p34 = scmp.eq.s32.totalorder %s33, 0
      %s36 = sadd.s32 %s35, 1
      %s37 = scalar_select %p34, %s35, %s36
      %p40 = pneg %p34
      %p41 = scmp.eq.s32.totalorder %s13, 1
      %p42 = por %p40, %p41
      %p43 = scmp.ne.s32.totalorder %s35, %s38
      %p44 = scmp.eq.s32.totalorder %s13, 0
      %p45 = por %p43, %p44
      %p46 = scmp.ne.s32.totalorder %s35, %s38
      %p47 = scmp.eq.s32.totalorder %s18, 1
      %p48 = por %p46, %p47
      %p49 = scmp.ne.s32.totalorder %s38, %s39
      %p50 = scmp.eq.s32.totalorder %s18, 0
      %p51 = por %p49, %p50
      %p52 = scmp.ne.s32.totalorder %s38, %s39
      %p53 = scmp.eq.s32.totalorder %s19, 1
      %p54 = por %p52, %p53
      %p56 = scmp.ne.s32.totalorder %s39, %s55
      %p57 = scmp.eq.s32.totalorder %s19, 0
      %p58 = por %p56, %p57
      %s60 = sadd.s32 %s59, 1
      %p63 = scmp.eq.s32.totalorder %s13, 1
      %p64 = scmp.ne.s32.totalorder %s59, %s61
      %p65 = scmp.eq.s32.totalorder %s13, 0
      %p66 = por %p64, %p65
      %p67 = scmp.ne.s32.totalorder %s59, %s61
      %p68 = scmp.eq.s32.totalorder %s18, 1
      %p69 = por %p67, %p68
      %p70 = scmp.ne.s32.totalorder %s61, %s62
      %p71 = scmp.eq.s32.totalorder %s18, 0
      %p72 = por %p70, %p71
      %p73 = scmp.ne.s32.totalorder %s61, %s62
      %p74 = scmp.eq.s32.totalorder %s19, 1
      %p75 = por %p73, %p74
      %p77 = scmp.ne.s32.totalorder %s62, %s76
      %p78 = scmp.eq.s32.totalorder %s19, 0
      %p79 = por %p77, %p78
      %s81 = sadd.s32 %s80, 1
      %p84 = scmp.eq.s32.totalorder %s13, 1
      %p85 = scmp.ne.s32.totalorder %s80, %s82
      %p86 = scmp.eq.s32.totalorder %s13, 0
      %p87 = por %p85, %p86
      %p88 = scmp.ne.s32.totalorder %s80, %s82
      %p89 = scmp.eq.s32.totalorder %s18, 1
      %p90 = por %p88, %p89
      %p91 = scmp.ne.s32.totalorder %s82, %s83
      %p92 = scmp.eq.s32.totalorder %s18, 0
      %p93 = por %p91, %p92
      %p94 = scmp.ne.s32.totalorder %s82, %s83
      %p95 = scmp.eq.s32.totalorder %s19, 1
      %p96 = por %p94, %p95
      %p98 = scmp.ne.s32.totalorder %s83, %s97
      %p99 = scmp.eq.s32.totalorder %s19, 0
      %p100 = por %p98, %p99
      %s102 = sadd.s32 %s101, 1
      %p105 = scmp.eq.s32.totalorder %s13, 1
      %p106 = scmp.ne.s32.totalorder %s101, %s103
      %p107 = scmp.eq.s32.totalorder %s13, 0
      %p108 = por %p106, %p107
      %p109 = scmp.ne.s32.totalorder %s101, %s103
      %p110 = scmp.eq.s32.totalorder %s18, 1
      %p111 = por %p109, %p110
      %p112 = scmp.ne.s32.totalorder %s103, %s104
      %p113 = scmp.eq.s32.totalorder %s18, 0
      %p114 = por %p112, %p113
      %p115 = scmp.ne.s32.totalorder %s103, %s104
      %p116 = scmp.eq.s32.totalorder %s19, 1
      %p117 = por %p115, %p116
      %p119 = scmp.ne.s32.totalorder %s104, %s118
      %p120 = scmp.eq.s32.totalorder %s19, 0
      %p121 = por %p119, %p120
      %s123 = sadd.s32 %s122, 1
      %p126 = scmp.eq.s32.totalorder %s13, 1
      %p127 = scmp.ne.s32.totalorder %s122, %s124
      %p128 = scmp.eq.s32.totalorder %s13, 0
      %p129 = por %p127, %p128
      %p130 = scmp.ne.s32.totalorder %s122, %s124
      %p131 = scmp.eq.s32.totalorder %s18, 1
      %p132 = por %p130, %p131
      %p133 = scmp.ne.s32.totalorder %s124, %s125
      %p134 = scmp.eq.s32.totalorder %s18, 0
      %p135 = por %p133, %p134
      %p136 = scmp.ne.s32.totalorder %s124, %s125
      %p137 = scmp.eq.s32.totalorder %s19, 1
      %p138 = por %p136, %p137
      %p140 = scmp.ne.s32.totalorder %s125, %s139
      %p141 = scmp.eq.s32.totalorder %s19, 0
      %p142 = por %p140, %p141
      %p143 = scmp.le.s32.totalorder 1, %s13
      %p144 = scmp.lt.s32.totalorder %s13, 3
      %p145 = pnand %p143, %p144
      %p146 = pneg %p145
      // Predicated region
      $region9: #{tpu_custom_call.1} parent=5 // pred_check
        _
      $region10: #{tpu_custom_call.1} parent=5 // pred_check_branch
        %148 = sbr.rel (%p145) target = $region12
      $region11: #{tpu_custom_call.1} parent=5 // pred_region
        %s149 = ssub.s32 %s13, 1
        // Predicated region
        $region13: #{tpu_custom_call.1} parent=11 // pred_check
          %p150 = pneg %p51
        $region14: #{tpu_custom_call.1} parent=11 // pred_check_branch
          %152 = sbr.rel (%p150) target = $region16
        $region15: #{tpu_custom_call.1} parent=11 // pred_region
          %s153 = smul.u32 8, %s23
          %p154 = scmp.lt.s32.totalorder %s153, 7
          %s155 = scalar_select %p154, %s153, 7
          %s156 = smul.addr %s155, 8
          %s157 = scalar_lea.vmem %s0, %s156
          %s158 = smul.u32 8, %s23
        $region16: #{tpu_custom_call.1} parent=11 // pred_fallthru
          _
        // Predicated region
        $region17: #{tpu_custom_call.1} parent=11 // pred_check
          %p159 = pneg %p72
        $region18: #{tpu_custom_call.1} parent=11 // pred_check_branch
          %161 = sbr.rel (%p159) target = $region20
        $region19: #{tpu_custom_call.1} parent=11 // pred_region
          _
        $region20: #{tpu_custom_call.1} parent=11 // pred_fallthru
          _
        // Predicated region
        $region21: #{tpu_custom_call.1} parent=11 // pred_check
          %p162 = pneg %p93
        $region22: #{tpu_custom_call.1} parent=11 // pred_check_branch
          %164 = sbr.rel (%p162) target = $region24
        $region23: #{tpu_custom_call.1} parent=11 // pred_region
          _
        $region24: #{tpu_custom_call.1} parent=11 // pred_fallthru
          _
      $region12: #{tpu_custom_call.1} parent=5 // pred_fallthru
        _
      %p165 = scmp.lt.s32.totalorder %s13, 2
      // Predicated region
      $region25: #{tpu_custom_call.1} parent=5 // pred_check
        %p166 = pneg %p165
      $region26: #{tpu_custom_call.1} parent=5 // pred_check_branch
        %168 = sbr.rel (%p166) target = $region28
      $region27: #{tpu_custom_call.1} parent=5 // pred_region
        _
      $region28: #{tpu_custom_call.1} parent=5 // pred_fallthru
        _
      %p169 = scmp.le.s32.totalorder 1, %s13
      %p170 = scmp.lt.s32.totalorder %s13, 3
      %p171 = pnand %p169, %p170
      %p172 = pneg %p171
      // Predicated region
      $region29: #{tpu_custom_call.1} parent=5 // pred_check
        _
      $region30: #{tpu_custom_call.1} parent=5 // pred_check_branch
        %174 = sbr.rel (%p171) target = $region32
      $region31: #{tpu_custom_call.1} parent=5 // pred_region
        %s175 = ssub.s32 %s13, 1
        %s176 = smul.u32 8, %s23
        %p177 = scmp.lt.s32.totalorder %s176, 7
        %s178 = scalar_select %p177, %s176, 7
        %s179 = smul.addr %s178, 8
        %s180 = scalar_lea.vmem %s0, %s179
        %p181 = pneg %p51
        %p182 = pneg %p48
        %p183 = pneg %p72
        %p184 = pneg %p69
        %p185 = pneg %p93
        %p186 = pneg %p90
        %p187 = pneg %p114
        %p188 = pneg %p111
        %p189 = pneg %p135
        %p190 = pneg %p132
        %s191 = smul.u32 8, %s23
        %p192 = scmp.lt.s32.totalorder %s191, 7
        %s193 = scalar_select %p192, %s191, 7
        %s194 = smul.addr %s193, 8
        %s195 = scalar_lea.vmem %s0, %s194
        %s196 = smul.u32 8, %s23
        %p197 = scmp.eq.s32.totalorder %s22, 0
        %p198 = scmp.eq.s32.totalorder %s23, 0
        %p199 = pnand %p197, %p198
        %p200 = pneg %p199
        // Predicated region
        $region33: #{tpu_custom_call.1} parent=31 // pred_check
          _
        $region34: #{tpu_custom_call.1} parent=31 // pred_check_branch
          %202 = sbr.rel (%p199) target = $region36
        $region35: #{tpu_custom_call.1} parent=31 // pred_region
          %vm203 = vcmask 122880
          %204 = vst.msk [vmem:[#allocation2] sm:$0x1] %vm203, 0.0
        $region36: #{tpu_custom_call.1} parent=31 // pred_fallthru
          _
        // Predicated region
        $region37: #{tpu_custom_call.1} parent=31 // pred_check
          %p205 = pneg %p197
        $region38: #{tpu_custom_call.1} parent=31 // pred_check_branch
          %207 = sbr.rel (%p205) target = $region40
        $region39: #{tpu_custom_call.1} parent=31 // pred_region
          %v208 = vld [vmem:[#allocation2] sm:$0x1]
          %v209 = vld [vmem:[%s195] sm:$0xff]
          %v210 = vld [vmem:[%s195 + $0x8] sm:$0xff]
          %v211 = vld [vmem:[%s195 + $0x10] sm:$0xff]
          %v212 = vld [vmem:[%s195 + $0x18] sm:$0xff]
          %v213 = vld [vmem:[%s195 + $0x20] sm:$0xff]
          %v214 = vld [vmem:[%s195 + $0x28] sm:$0xff]
          %v215 = vld [vmem:[%s195 + $0x30] sm:$0xff]
          %v216 = vld [vmem:[%s195 + $0x38] sm:$0xff]
          %vm217 = vcmask 130048
          %v218 = vsel %vm217, %v209, 0.0
          %v219 = vsel %vm217, %v210, 0.0
          %v220 = vadd.f32 %v218, %v219
          %v221 = vsel %vm217, %v211, 0.0
          %v222 = vadd.f32 %v220, %v221
          %v223 = vsel %vm217, %v212, 0.0
          %v224 = vadd.f32 %v222, %v223
          %v225 = vsel %vm217, %v213, 0.0
          %v226 = vadd.f32 %v224, %v225
          %v227 = vsel %vm217, %v214, 0.0
          %v228 = vadd.f32 %v226, %v227
          %v229 = vsel %vm217, %v215, 0.0
          %v230 = vadd.f32 %v228, %v229
          %v231 = vsel %vm217, %v216, 0.0
          %v232 = vadd.f32 %v230, %v231
          %v233 = vrot.slane %v232, 4
          %v234 = vadd.f32 %v232, %v233
          %v235 = vrot.slane %v234, 2
          %v236 = vadd.f32 %v234, %v235
          %v237 = vrot.slane %v236, 1
          %v238 = vadd.f32 %v236, %v237
          %v239 = vadd.f32 %v208, %v238
          %vm240 = vcmask 122880
          %241 = vst.msk [vmem:[#allocation2] sm:$0x1] %vm240, %v239
        $region40: #{tpu_custom_call.1} parent=31 // pred_fallthru
          _
        // Predicated region
        $region41: #{tpu_custom_call.1} parent=31 // pred_check
          _
        $region42: #{tpu_custom_call.1} parent=31 // pred_check_branch
          %243 = sbr.rel (%p199) target = $region44
        $region43: #{tpu_custom_call.1} parent=31 // pred_region
          %v244 = vld [vmem:[#allocation2] sm:$0x1]
          %v245 = vrcp.pop 16.0
          %v246 = vmul.f32 16.0, %v245
          %v247 = vsub.f32 1.0, %v246
          %v248 = vmul.f32 %v245, %v247
          %v249 = vadd.f32 %v245, %v248
          %vm250 = vweird.f32 %v245
          %v251 = vsel %vm250, %v245, %v249
          %v252 = vmul.f32 %v244, %v251
          %vm253 = vcmask 122880
          %254 = vst.msk [vmem:[#allocation3] sm:$0x1] %vm253, %v252
        $region44: #{tpu_custom_call.1} parent=31 // pred_fallthru
          _
        %p255 = scmp.eq.s32.totalorder %s22, 1
        %p256 = pnand %p255, %p198
        %p257 = pneg %p256
        // Predicated region
        $region45: #{tpu_custom_call.1} parent=31 // pred_check
          _
        $region46: #{tpu_custom_call.1} parent=31 // pred_check_branch
          %259 = sbr.rel (%p256) target = $region48
        $region47: #{tpu_custom_call.1} parent=31 // pred_region
          %vm260 = vcmask 122880
          %261 = vst.msk [vmem:[#allocation4] sm:$0x1] %vm260, 0.0
        $region48: #{tpu_custom_call.1} parent=31 // pred_fallthru
          _
        // Predicated region
        $region49: #{tpu_custom_call.1} parent=31 // pred_check
          %p262 = pneg %p255
        $region50: #{tpu_custom_call.1} parent=31 // pred_check_branch
          %264 = sbr.rel (%p262) target = $region52
        $region51: #{tpu_custom_call.1} parent=31 // pred_region
          %v265 = vld [vmem:[%s195] sm:$0xff]
          %v266 = vld [vmem:[%s195 + $0x8] sm:$0xff]
          %v267 = vld [vmem:[%s195 + $0x10] sm:$0xff]
          %v268 = vld [vmem:[%s195 + $0x18] sm:$0xff]
          %v269 = vld [vmem:[%s195 + $0x20] sm:$0xff]
          %v270 = vld [vmem:[%s195 + $0x28] sm:$0xff]
          %v271 = vld [vmem:[%s195 + $0x30] sm:$0xff]
          %v272 = vld [vmem:[%s195 + $0x38] sm:$0xff]
          %v273 = vld [vmem:[#allocation3] sm:$0x1]
          %v275 = vperm.slane %v273, 0
          %v277 = vsub.f32 %v265, %v275
          %v278 = vsub.f32 %v266, %v275
          %v279 = vsub.f32 %v267, %v275
          %v280 = vsub.f32 %v268, %v275
          %v281 = vsub.f32 %v269, %v275
          %v282 = vsub.f32 %v270, %v275
          %v283 = vsub.f32 %v271, %v275
          %v284 = vsub.f32 %v272, %v275
          %v285 = vld [vmem:[#allocation4] sm:$0x1]
          %v286 = vmul.f32 %v277, %v277
          %v287 = vmul.f32 %v278, %v278
          %v288 = vmul.f32 %v279, %v279
          %v289 = vmul.f32 %v280, %v280
          %v290 = vmul.f32 %v281, %v281
          %v291 = vmul.f32 %v282, %v282
          %v292 = vmul.f32 %v283, %v283
          %v293 = vmul.f32 %v284, %v284
          %vm294 = vcmask 130048
          %v295 = vsel %vm294, %v286, 0.0
          %v296 = vsel %vm294, %v287, 0.0
          %v297 = vadd.f32 %v295, %v296
          %v298 = vsel %vm294, %v288, 0.0
          %v299 = vadd.f32 %v297, %v298
          %v300 = vsel %vm294, %v289, 0.0
          %v301 = vadd.f32 %v299, %v300
          %v302 = vsel %vm294, %v290, 0.0
          %v303 = vadd.f32 %v301, %v302
          %v304 = vsel %vm294, %v291, 0.0
          %v305 = vadd.f32 %v303, %v304
          %v306 = vsel %vm294, %v292, 0.0
          %v307 = vadd.f32 %v305, %v306
          %v308 = vsel %vm294, %v293, 0.0
          %v309 = vadd.f32 %v307, %v308
          %v310 = vrot.slane %v309, 4
          %v311 = vadd.f32 %v309, %v310
          %v312 = vrot.slane %v311, 2
          %v313 = vadd.f32 %v311, %v312
          %v314 = vrot.slane %v313, 1
          %v315 = vadd.f32 %v313, %v314
          %v316 = vadd.f32 %v285, %v315
          %vm317 = vcmask 122880
          %318 = vst.msk [vmem:[#allocation4] sm:$0x1] %vm317, %v316
        $region52: #{tpu_custom_call.1} parent=31 // pred_fallthru
          _
        // Predicated region
        $region53: #{tpu_custom_call.1} parent=31 // pred_check
          _
        $region54: #{tpu_custom_call.1} parent=31 // pred_check_branch
          %320 = sbr.rel (%p256) target = $region56
        $region55: #{tpu_custom_call.1} parent=31 // pred_region
          %v321 = vld [vmem:[#allocation3] sm:$0x1]
          %v322 = vld [vmem:[#allocation4] sm:$0x1]
          %v323 = vmul.f32 %v321, 48.0
          %v324 = vmul.f32 %v323, %v321
          %v325 = vsub.f32 %v322, %v324
          %v326 = vrcp.pop 16.0
          %v327 = vmul.f32 16.0, %v326
          %v328 = vsub.f32 1.0, %v327
          %v329 = vmul.f32 %v326, %v328
          %v330 = vadd.f32 %v326, %v329
          %vm331 = vweird.f32 %v326
          %v332 = vsel %vm331, %v326, %v330
          %v333 = vmul.f32 %v325, %v332
          %v334 = vmax.f32 %v333, 0.0
          %v335 = vld [vmem:[%s1] sm:$0x1]
          %v336 = vadd.f32 %v334, 1e-05
          %v337 = vrsqrt.pop %v336
          %v338 = vmul.f32 %v337, %v336
          %v339 = vmul.f32 %v338, %v337
          %v340 = vmul.f32 0.5, %v339
          %v341 = vsub.f32 1.5, %v340
          %v342 = vmul.f32 %v337, %v341
          %vm343 = vweird.f32 %v336
          %vm344 = vweird.f32 %v337
          %vm345 = vmor %vm343, %vm344
          %v346 = vsel %vm345, %v337, %v342
          %v347 = vmul.f32 %v335, %v346
          %vm348 = vcmask 122880
          %349 = vst.msk [vmem:[#allocation5] sm:$0x1] %vm348, %v347
          %v350 = vld [vmem:[%s2] sm:$0x1]
          %v351 = vmul.f32 %v321, %v347
          %v352 = vsub.f32 %v350, %v351
          %353 = vst.msk [vmem:[#allocation7] sm:$0x1] %vm348, %v352
        $region56: #{tpu_custom_call.1} parent=31 // pred_fallthru
          _
        // Predicated region
        $region57: #{tpu_custom_call.1} parent=31 // pred_check
          %p354 = pneg %p111
        $region58: #{tpu_custom_call.1} parent=31 // pred_check_branch
          %356 = sbr.rel (%p354) target = $region60
        $region59: #{tpu_custom_call.1} parent=31 // pred_region
          %358 = vsyncadd [#allocation6], 0
          %s360 = sshll.u32 [#allocation5], 4
          %s361 = int_to_ptr.vmem [resolvable:$true] %s360
          %s362 = sshll.u32 %s3, 4
          %s363 = int_to_ptr.hbm [resolvable:$true] %s362
          %365 = dma.vmem_to_hbm [thread:$0]  %s361, 16, %s363, [#allocation6]
        $region60: #{tpu_custom_call.1} parent=31 // pred_fallthru
          _
        // Predicated region
        $region61: #{tpu_custom_call.1} parent=31 // pred_check
          %p366 = pneg %p132
        $region62: #{tpu_custom_call.1} parent=31 // pred_check_branch
          %368 = sbr.rel (%p366) target = $region64
        $region63: #{tpu_custom_call.1} parent=31 // pred_region
          %370 = vsyncadd [#allocation8], 0
          %s372 = sshll.u32 [#allocation7], 4
          %s373 = int_to_ptr.vmem [resolvable:$true] %s372
          %s374 = sshll.u32 %s4, 4
          %s375 = int_to_ptr.hbm [resolvable:$true] %s374
          %377 = dma.vmem_to_hbm [thread:$0]  %s373, 16, %s375, [#allocation8]
        $region64: #{tpu_custom_call.1} parent=31 // pred_fallthru
          _
        // Predicated region
        $region65: #{tpu_custom_call.1} parent=31 // pred_check
          %p378 = pneg %p111
        $region66: #{tpu_custom_call.1} parent=31 // pred_check_branch
          %380 = sbr.rel (%p378) target = $region68
        $region67: #{tpu_custom_call.1} parent=31 // pred_region
          %382 = dma.done [#allocation6], 16
        $region68: #{tpu_custom_call.1} parent=31 // pred_fallthru
          _
        // Predicated region
        $region69: #{tpu_custom_call.1} parent=31 // pred_check
          %p383 = pneg %p132
        $region70: #{tpu_custom_call.1} parent=31 // pred_check_branch
          %385 = sbr.rel (%p383) target = $region72
        $region71: #{tpu_custom_call.1} parent=31 // pred_region
          %387 = dma.done [#allocation8], 16
        $region72: #{tpu_custom_call.1} parent=31 // pred_fallthru
          _
      $region32: #{tpu_custom_call.1} parent=5 // pred_fallthru
        _
      %p388 = scmp.le.s32.totalorder 2, %s13
      // Predicated region
      $region73: #{tpu_custom_call.1} parent=5 // pred_check
        %p389 = pneg %p388
      $region74: #{tpu_custom_call.1} parent=5 // pred_check_branch
        %391 = sbr.rel (%p389) target = $region76
      $region75: #{tpu_custom_call.1} parent=5 // pred_region
        %s392 = ssub.s32 %s13, 2
      $region76: #{tpu_custom_call.1} parent=5 // pred_fallthru
        _
    $region6: #{tpu_custom_call.1} parent=1 // loop_footer
      %s17 = sadd.s32 1, %s13
    $region7: #{tpu_custom_call.1} parent=1 // loop_footer_branch
      %12 = sbr.rel target = $region3
    $region8: #{tpu_custom_call.1} parent=1 // loop_exit
      _
    %393 = vsyncpa [#allocation6], 1
    %s394 = scalar_lea.sflag [#allocation6], 1
    %395 = vsyncpa %s394, 1
    %396 = vsyncpa [#allocation8], 1

</llo_original>
